<compile_context>
chip_gen: v6e
topology: v6e:2x2x1
jax: 0.10.0
libtpu: 0.0.40
codegen_flags: <defaults>
</compile_context>

<pallas_src>
import functools

import jax
import jax.numpy as jnp
from jax.experimental import pallas as pl
from jax.experimental.pallas import tpu as pltpu


def _mlp_actor_kernel(x_ref, w1_ref, b1_ref, w2_ref, b2_ref, w3_ref, b3_ref,
                      o_ref, *, act_limit):
    # x_ref: (TM, obs_dim) f32 — cast to bf16 in-kernel for the MXU.
    x = x_ref[...].astype(jnp.bfloat16)

    # Hidden layer 1: Linear + ReLU (f32 accumulate, f32 elementwise).
    h1 = jnp.dot(x, w1_ref[...], preferred_element_type=jnp.float32)
    h1 = jnp.maximum(h1 + b1_ref[...], 0.0)

    # Hidden layer 2: Linear + ReLU.
    h2 = jnp.dot(h1.astype(jnp.bfloat16), w2_ref[...],
                 preferred_element_type=jnp.float32)
    h2 = jnp.maximum(h2 + b2_ref[...], 0.0)

    # Output layer: Linear + Tanh, scaled by act_limit (narrow N = act_dim).
    a = jnp.dot(h2.astype(jnp.bfloat16), w3_ref[...],
                preferred_element_type=jnp.float32)
    a = jnp.tanh(a + b3_ref[...])
    o_ref[...] = (act_limit * a).astype(o_ref.dtype)


def prepare_params(params):
    """One-time parameter prep: bf16 weights (MXU dtype), f32 (1, n) biases."""
    prepped = {}
    for name, v in params.items():
        if name.startswith("w"):
            prepped[name] = jnp.asarray(v, jnp.bfloat16)
        else:
            prepped[name] = jnp.asarray(v, jnp.float32).reshape(1, -1)
    return prepped


def _round_up(x, m):
    return ((x + m - 1) // m) * m


def _choose_tm(batch, tm_max):
    """Pick a batch tile: big (amortize per-step overhead), sublane-aligned,
    and — when several tiles are needed — an even count of near-equal tiles so
    the 'parallel' axis splits evenly across v7x's two TensorCores."""
    tm_max = max(8, (tm_max // 8) * 8)
    if batch <= 8:
        # Single block whose sublane dim equals the full array dim (legal, no OOB).
        return batch
    n_tiles = pl.cdiv(batch, tm_max)
    if n_tiles > 1 and n_tiles % 2:
        n_tiles += 1
    return _round_up(pl.cdiv(batch, n_tiles), 8)


def mlp_actor_forward(obs, params, act_limit, *, tm_max=2048):
    """obs: [batch, ...] float array. params: dict w1,b1,w2,b2,w3,b3
    (ideally pre-converted via prepare_params).

    Matches MLPActor.forward: act_limit * pi(obs.reshape(batch, -1)).
    """
    batch = obs.shape[0]
    obs2d = obs.reshape(batch, -1).astype(jnp.float32)  # cast to bf16 in-kernel
    obs_dim = obs2d.shape[1]

    # Trace-time check only; no-op (no extra XLA ops) when already prepared.
    if params["w1"].dtype != jnp.bfloat16:
        params = prepare_params(params)
    w1, b1 = params["w1"], params["b1"]
    w2, b2 = params["w2"], params["b2"]
    w3, b3 = params["w3"], params["b3"]
    h1_dim, h2_dim, act_dim = w1.shape[1], w2.shape[1], w3.shape[1]

    tm = _choose_tm(batch, tm_max)
    grid = (pl.cdiv(batch, tm),)   # ragged last tile handled by Pallas masking

    kernel = functools.partial(_mlp_actor_kernel, act_limit=float(act_limit))

    weight_bytes = 2 * (obs_dim * h1_dim + h1_dim * h2_dim + h2_dim * act_dim) \
        + 4 * (h1_dim + h2_dim + act_dim)
    cost = pl.CostEstimate(
        flops=2 * batch * (obs_dim * h1_dim + h1_dim * h2_dim + h2_dim * act_dim),
        transcendentals=batch * act_dim,
        bytes_accessed=batch * obs_dim * 4 + batch * act_dim * 4 + weight_bytes,
    )

    return pl.pallas_call(
        kernel,
        out_shape=jax.ShapeDtypeStruct((batch, act_dim), jnp.float32),
        grid=grid,
        in_specs=[
            # obs: streamed per batch tile.
            pl.BlockSpec((tm, obs_dim), lambda i: (i, 0)),
            # weights / biases: full-extent blocks, VMEM-resident across grid.
            pl.BlockSpec((obs_dim, h1_dim), lambda i: (0, 0)),
            pl.BlockSpec((1, h1_dim), lambda i: (0, 0)),
            pl.BlockSpec((h1_dim, h2_dim), lambda i: (0, 0)),
            pl.BlockSpec((1, h2_dim), lambda i: (0, 0)),
            pl.BlockSpec((h2_dim, act_dim), lambda i: (0, 0)),
            pl.BlockSpec((1, act_dim), lambda i: (0, 0)),
        ],
        out_specs=pl.BlockSpec((tm, act_dim), lambda i: (i, 0)),
        compiler_params=pltpu.CompilerParams(
            dimension_semantics=("parallel",)),
        cost_estimate=cost,
    )(obs2d, w1, b1, w2, b2, w3, b3)


def init_params(key, obs_dim, hidden_sizes, act_dim):
    """Deterministic synthetic init (uniform, PyTorch-Linear-style bound)."""
    sizes = [obs_dim] + list(hidden_sizes) + [act_dim]
    params = {}
    for j in range(len(sizes) - 1):
        fan_in, fan_out = sizes[j], sizes[j + 1]
        key, kw, kb = jax.random.split(key, 3)
        bound = 1.0 / jnp.sqrt(fan_in)
        params[f"w{j + 1}"] = jax.random.uniform(
            kw, (fan_in, fan_out), jnp.float32, -bound, bound)
        params[f"b{j + 1}"] = jax.random.uniform(
            kb, (1, fan_out), jnp.float32, -bound, bound)
    return params


def _reference(obs, params, act_limit):
    """Plain-JAX reference using the same bf16/f32 mixed-precision scheme."""
    x = obs.reshape(obs.shape[0], -1).astype(jnp.float32).astype(jnp.bfloat16)
    w1 = params["w1"].astype(jnp.bfloat16)
    w2 = params["w2"].astype(jnp.bfloat16)
    w3 = params["w3"].astype(jnp.bfloat16)
    h1 = jnp.maximum(
        jnp.dot(x, w1, preferred_element_type=jnp.float32) + params["b1"], 0.0)
    h2 = jnp.maximum(
        jnp.dot(h1.astype(jnp.bfloat16), w2,
                preferred_element_type=jnp.float32) + params["b2"], 0.0)
    a = jnp.tanh(
        jnp.dot(h2.astype(jnp.bfloat16), w3,
                preferred_element_type=jnp.float32) + params["b3"])
    return act_limit * a


if __name__ == "__main__":
    obs_dim = 16
    hidden_sizes = (32, 32)
    act_dim = 4
    act_limit = 2.0

    key = jax.random.PRNGKey(0)
    key, k_obs_small, k_obs_big = jax.random.split(key, 3)
    params = init_params(key, obs_dim, hidden_sizes, act_dim)
    prepped = prepare_params(params)   # hoisted one-time casts/reshapes

    # Jit the whole forward so reshape/cast/slice around the kernel fuse away.
    fwd = jax.jit(functools.partial(mlp_actor_forward, act_limit=act_limit))

    # Small batch (matches the module's typical single-step actor call).
    obs_small = jax.random.normal(k_obs_small, (2, obs_dim), jnp.float32)
    out_small = fwd(obs_small, prepped)
    jax.block_until_ready(out_small)
    ref_small = _reference(obs_small, params, act_limit)
    assert out_small.shape == (2, act_dim)
    assert jnp.allclose(out_small, ref_small, atol=2e-3, rtol=2e-3)

    # Larger, non-8-multiple batch: exercises the masked ragged tail (no pad).
    obs_big = jax.random.normal(k_obs_big, (300, obs_dim), jnp.float32)
    out_big = fwd(obs_big, prepped)
    jax.block_until_ready(out_big)
    ref_big = _reference(obs_big, params, act_limit)
    assert out_big.shape == (300, act_dim)
    assert jnp.allclose(out_big, ref_big, atol=2e-3, rtol=2e-3)

    # Force the multi-tile path (balanced even tile count + masked tail).
    out_tiled = mlp_actor_forward(obs_big, prepped, act_limit, tm_max=128)
    jax.block_until_ready(out_tiled)
    assert out_tiled.shape == (300, act_dim)
    assert jnp.allclose(out_tiled, ref_big, atol=2e-3, rtol=2e-3)

    print("KERNEL_OK")
</pallas_src>

<mosaic_0001>
module attributes {stable_mosaic.version = 11 : i64} {
  func.func @_mlp_actor_kernel(%arg0: i32, %arg1: memref<2x16xf32, #tpu.memory_space<vmem>>, %arg2: memref<16x32xbf16, #tpu.memory_space<vmem>>, %arg3: memref<1x32xf32, #tpu.memory_space<vmem>>, %arg4: memref<32x32xbf16, #tpu.memory_space<vmem>>, %arg5: memref<1x32xf32, #tpu.memory_space<vmem>>, %arg6: memref<32x4xbf16, #tpu.memory_space<vmem>>, %arg7: memref<1x4xf32, #tpu.memory_space<vmem>>, %arg8: memref<2x4xf32, #tpu.memory_space<vmem>>) attributes {dimension_semantics = [#tpu.dimension_semantics<parallel>], iteration_bounds = array<i64: 1>, scalar_prefetch = 0 : i64, scratch_operands = 0 : i64, tpu.core_type = #tpu.core_type<tc>, window_params = [{transform_indices = @transform_0, window_bounds = array<i64: 2, 16>}, {pipeline_mode = #tpu.pipeline_mode<synchronous>, transform_indices = @transform_1, window_bounds = array<i64: 16, 32>}, {pipeline_mode = #tpu.pipeline_mode<synchronous>, transform_indices = @transform_2, window_bounds = array<i64: 1, 32>}, {pipeline_mode = #tpu.pipeline_mode<synchronous>, transform_indices = @transform_3, window_bounds = array<i64: 32, 32>}, {pipeline_mode = #tpu.pipeline_mode<synchronous>, transform_indices = @transform_4, window_bounds = array<i64: 1, 32>}, {pipeline_mode = #tpu.pipeline_mode<synchronous>, transform_indices = @transform_5, window_bounds = array<i64: 32, 4>}, {pipeline_mode = #tpu.pipeline_mode<synchronous>, transform_indices = @transform_6, window_bounds = array<i64: 1, 4>}, {transform_indices = @transform_7, window_bounds = array<i64: 2, 4>}]} {
    %c0 = arith.constant 0 : index
    %c0_0 = arith.constant 0 : index
    %0 = vector.load %arg1[%c0, %c0_0] : memref<2x16xf32, #tpu.memory_space<vmem>>, vector<2x16xf32>
    %1 = arith.truncf %0 : vector<2x16xf32> to vector<2x16xbf16>
    %c0_1 = arith.constant 0 : index
    %c0_2 = arith.constant 0 : index
    %2 = vector.load %arg2[%c0_1, %c0_2] : memref<16x32xbf16, #tpu.memory_space<vmem>>, vector<16x32xbf16>
    %cst = arith.constant dense<0.000000e+00> : vector<2x32xf32>
    %3 = tpu.matmul %1, %2, %cst {dimension_numbers = #tpu.dot_dimension_numbers<[1], [0], [0], [1], [0, 0, 1, 1], [], []>} : vector<2x16xbf16>, vector<16x32xbf16>, vector<2x32xf32> -> vector<2x32xf32>
    %c0_3 = arith.constant 0 : index
    %c0_4 = arith.constant 0 : index
    %4 = vector.load %arg3[%c0_3, %c0_4] : memref<1x32xf32, #tpu.memory_space<vmem>>, vector<1x32xf32>
    %5 = vector.broadcast %4 : vector<1x32xf32> to vector<2x32xf32>
    %6 = arith.addf %3, %5 : vector<2x32xf32>
    %cst_5 = arith.constant 0.000000e+00 : f32
    %7 = vector.broadcast %cst_5 : f32 to vector<2x32xf32>
    %8 = arith.maximumf %6, %7 : vector<2x32xf32>
    %9 = arith.truncf %8 : vector<2x32xf32> to vector<2x32xbf16>
    %c0_6 = arith.constant 0 : index
    %c0_7 = arith.constant 0 : index
    %10 = vector.load %arg4[%c0_6, %c0_7] : memref<32x32xbf16, #tpu.memory_space<vmem>>, vector<32x32xbf16>
    %cst_8 = arith.constant dense<0.000000e+00> : vector<2x32xf32>
    %11 = tpu.matmul %9, %10, %cst_8 {dimension_numbers = #tpu.dot_dimension_numbers<[1], [0], [0], [1], [0, 0, 1, 1], [], []>} : vector<2x32xbf16>, vector<32x32xbf16>, vector<2x32xf32> -> vector<2x32xf32>
    %c0_9 = arith.constant 0 : index
    %c0_10 = arith.constant 0 : index
    %12 = vector.load %arg5[%c0_9, %c0_10] : memref<1x32xf32, #tpu.memory_space<vmem>>, vector<1x32xf32>
    %13 = vector.broadcast %12 : vector<1x32xf32> to vector<2x32xf32>
    %14 = arith.addf %11, %13 : vector<2x32xf32>
    %cst_11 = arith.constant 0.000000e+00 : f32
    %15 = vector.broadcast %cst_11 : f32 to vector<2x32xf32>
    %16 = arith.maximumf %14, %15 : vector<2x32xf32>
    %17 = arith.truncf %16 : vector<2x32xf32> to vector<2x32xbf16>
    %c0_12 = arith.constant 0 : index
    %c0_13 = arith.constant 0 : index
    %18 = vector.load %arg6[%c0_12, %c0_13] : memref<32x4xbf16, #tpu.memory_space<vmem>>, vector<32x4xbf16>
    %cst_14 = arith.constant dense<0.000000e+00> : vector<2x4xf32>
    %19 = tpu.matmul %17, %18, %cst_14 {dimension_numbers = #tpu.dot_dimension_numbers<[1], [0], [0], [1], [0, 0, 1, 1], [], []>} : vector<2x32xbf16>, vector<32x4xbf16>, vector<2x4xf32> -> vector<2x4xf32>
    %c0_15 = arith.constant 0 : index
    %c0_16 = arith.constant 0 : index
    %20 = vector.load %arg7[%c0_15, %c0_16] : memref<1x4xf32, #tpu.memory_space<vmem>>, vector<1x4xf32>
    %21 = vector.broadcast %20 : vector<1x4xf32> to vector<2x4xf32>
    %22 = arith.addf %19, %21 : vector<2x4xf32>
    %23 = math.tanh %22 : vector<2x4xf32>
    %cst_17 = arith.constant 2.000000e+00 : f32
    %24 = vector.broadcast %cst_17 : f32 to vector<2x4xf32>
    %25 = arith.mulf %24, %23 : vector<2x4xf32>
    %c0_18 = arith.constant 0 : index
    %c0_19 = arith.constant 0 : index
    %26 = vector.load %arg8[%c0_18, %c0_19] : memref<2x4xf32, #tpu.memory_space<vmem>>, vector<2x4xf32>
    tpu.vector_store %arg8[%c0_18, %c0_19], %25 {strides = array<i32>} : memref<2x4xf32, #tpu.memory_space<vmem>>, vector<2x4xf32>,
    return
  }
  func.func @transform_0(%arg0: i32) -> (i32, i32) {
    %c0_i32 = arith.constant 0 : i32
    %c0_i32_0 = arith.constant 0 : i32
    return %arg0, %c0_i32 : i32, i32
  }
  func.func @transform_1(%arg0: i32) -> (i32, i32) {
    %c0_i32 = arith.constant 0 : i32
    %c0_i32_0 = arith.constant 0 : i32
    %c0_i32_1 = arith.constant 0 : i32
    return %c0_i32, %c0_i32_0 : i32, i32
  }
  func.func @transform_2(%arg0: i32) -> (i32, i32) {
    %c0_i32 = arith.constant 0 : i32
    %c0_i32_0 = arith.constant 0 : i32
    %c0_i32_1 = arith.constant 0 : i32
    return %c0_i32, %c0_i32_0 : i32, i32
  }
  func.func @transform_3(%arg0: i32) -> (i32, i32) {
    %c0_i32 = arith.constant 0 : i32
    %c0_i32_0 = arith.constant 0 : i32
    %c0_i32_1 = arith.constant 0 : i32
    return %c0_i32, %c0_i32_0 : i32, i32
  }
  func.func @transform_4(%arg0: i32) -> (i32, i32) {
    %c0_i32 = arith.constant 0 : i32
    %c0_i32_0 = arith.constant 0 : i32
    %c0_i32_1 = arith.constant 0 : i32
    return %c0_i32, %c0_i32_0 : i32, i32
  }
  func.func @transform_5(%arg0: i32) -> (i32, i32) {
    %c0_i32 = arith.constant 0 : i32
    %c0_i32_0 = arith.constant 0 : i32
    %c0_i32_1 = arith.constant 0 : i32
    return %c0_i32, %c0_i32_0 : i32, i32
  }
  func.func @transform_6(%arg0: i32) -> (i32, i32) {
    %c0_i32 = arith.constant 0 : i32
    %c0_i32_0 = arith.constant 0 : i32
    %c0_i32_1 = arith.constant 0 : i32
    return %c0_i32, %c0_i32_0 : i32, i32
  }
  func.func @transform_7(%arg0: i32) -> (i32, i32) {
    %c0_i32 = arith.constant 0 : i32
    %c0_i32_0 = arith.constant 0 : i32
    return %arg0, %c0_i32 : i32, i32
  }
}

</mosaic_0001>

<llo_original>
// kernel: mlp_actor_forward.1
$region0: #{mlp_actor_forward.1}
  #allocation0 [shape = 'u32[]', space=smem, size = 0x4, offset = 0x4, fixed_abs, tag = 'smem constant byte address 0x4 - core index']
  #allocation1 [shape = 'u32[144,128]{1,0:T(1,128)}', space=vmem, size = 0x12000, scoped, tag = 'internal scratch']
  %s0 = inlined_call_operand.vmem [shape: f32[2,16], index: 0, kind: input, shape index: {}]
  %s1 = inlined_call_operand.vmem [shape: bf16[16,32], index: 1, kind: input, shape index: {}]
  %s2 = inlined_call_operand.hbm [shape: f32[1,32], index: 2, kind: input, shape index: {}]
  %s3 = inlined_call_operand.vmem [shape: bf16[32,32], index: 3, kind: input, shape index: {}]
  %s4 = inlined_call_operand.hbm [shape: f32[1,32], index: 4, kind: input, shape index: {}]
  %s5 = inlined_call_operand.vmem [shape: bf16[32,4], index: 5, kind: input, shape index: {}]
  %s6 = inlined_call_operand.hbm [shape: f32[1,4], index: 6, kind: input, shape index: {}]
  %s7 = inlined_call_operand.hbm [shape: f32[2,4], index: 7, kind: output, shape index: {}]
  %s8 = sld [smem:[#allocation0]]
  $region50: #{mlp_actor_forward.1} parent=0
    _
  %s10 = ssub.s32 1, %s8
  %s11 = scalar_select 0, %s10, %s8
  $region1: #{mlp_actor_forward.1} parent=0
    #allocation2 [shape = 'u8[512]{0}', space=vmem, size = 0x400, scoped, tag = 'input window, operand 2, single buffered']
    #allocation3 [shape = 's32[1]{0}', space=sflag, size = 0x4, scoped, tag = 'scoped memory for mlp_actor_forward.1']
    #allocation4 [shape = 's32[1]{0}', space=sflag, size = 0x4, scoped, tag = 'scoped memory for mlp_actor_forward.1']
    #allocation5 [shape = 'u8[512]{0}', space=vmem, size = 0x400, scoped, tag = 'input window, operand 4, single buffered']
    #allocation6 [shape = 's32[1]{0}', space=sflag, size = 0x4, scoped, tag = 'scoped memory for mlp_actor_forward.1']
    #allocation7 [shape = 'u8[512]{0}', space=vmem, size = 0x400, scoped, tag = 'input window, operand 6, single buffered']
    #allocation8 [shape = 'u8[1024]{0}', space=vmem, size = 0x400, scoped, tag = 'output window, operand 0, single buffered']
    %12 = vsyncpa [#allocation3], 0
    %13 = vsyncpa [#allocation6], 0
    %14 = vsyncpa [#allocation4], 0
    // Predicated region
    $region2: #{mlp_actor_forward.1} parent=1 // pred_check
      _
    $region3: #{mlp_actor_forward.1} parent=1 // pred_check_branch
      %16 = sbr.rel (0) target = $region5
    $region4: #{mlp_actor_forward.1} parent=1 // pred_region
      _
    $region5: #{mlp_actor_forward.1} parent=1 // pred_fallthru
      _
    // Predicated region
    $region6: #{mlp_actor_forward.1} parent=1 // pred_check
      _
    $region7: #{mlp_actor_forward.1} parent=1 // pred_check_branch
      %18 = sbr.rel (0) target = $region9
    $region8: #{mlp_actor_forward.1} parent=1 // pred_region
      _
    $region9: #{mlp_actor_forward.1} parent=1 // pred_fallthru
      _
    // Predicated region
    $region10: #{mlp_actor_forward.1} parent=1 // pred_check
      _
    $region11: #{mlp_actor_forward.1} parent=1 // pred_check_branch
      %20 = sbr.rel (0) target = $region13
    $region12: #{mlp_actor_forward.1} parent=1 // pred_region
      %s22 = ssub.s32 16, 16
      %23 = vsyncadd [#allocation3], %s22
      %s25 = sshll.u32 [#allocation2], 4
      %s26 = int_to_ptr.vmem [resolvable:$true] %s25
      %28 = dma.hbm_to_vmem [thread:$0]  %s2, 16, %s26, [#allocation3]
    $region13: #{mlp_actor_forward.1} parent=1 // pred_fallthru
      _
    // Predicated region
    $region14: #{mlp_actor_forward.1} parent=1 // pred_check
      _
    $region15: #{mlp_actor_forward.1} parent=1 // pred_check_branch
      %30 = sbr.rel (0) target = $region17
    $region16: #{mlp_actor_forward.1} parent=1 // pred_region
      _
    $region17: #{mlp_actor_forward.1} parent=1 // pred_fallthru
      _
    // Predicated region
    $region18: #{mlp_actor_forward.1} parent=1 // pred_check
      _
    $region19: #{mlp_actor_forward.1} parent=1 // pred_check_branch
      %32 = sbr.rel (0) target = $region21
    $region20: #{mlp_actor_forward.1} parent=1 // pred_region
      %s34 = ssub.s32 16, 16
      %35 = vsyncadd [#allocation6], %s34
      %s37 = sshll.u32 [#allocation5], 4
      %s38 = int_to_ptr.vmem [resolvable:$true] %s37
      %40 = dma.hbm_to_vmem [thread:$0]  %s4, 16, %s38, [#allocation6]
    $region21: #{mlp_actor_forward.1} parent=1 // pred_fallthru
      _
    // Predicated region
    $region22: #{mlp_actor_forward.1} parent=1 // pred_check
      _
    $region23: #{mlp_actor_forward.1} parent=1 // pred_check_branch
      %42 = sbr.rel (0) target = $region25
    $region24: #{mlp_actor_forward.1} parent=1 // pred_region
      _
    $region25: #{mlp_actor_forward.1} parent=1 // pred_fallthru
      _
    // Predicated region
    $region26: #{mlp_actor_forward.1} parent=1 // pred_check
      _
    $region27: #{mlp_actor_forward.1} parent=1 // pred_check_branch
      %44 = sbr.rel (0) target = $region29
    $region28: #{mlp_actor_forward.1} parent=1 // pred_region
      %s46 = ssub.s32 16, 16
      %47 = vsyncadd [#allocation6], %s46
      %s49 = sshll.u32 [#allocation7], 4
      %s50 = int_to_ptr.vmem [resolvable:$true] %s49
      %52 = dma.hbm_to_vmem [thread:$0]  %s6, 16, %s50, [#allocation6]
    $region29: #{mlp_actor_forward.1} parent=1 // pred_fallthru
      _
    // Predicated region
    $region30: #{mlp_actor_forward.1} parent=1 // pred_check
      _
    $region31: #{mlp_actor_forward.1} parent=1 // pred_check_branch
      %54 = sbr.rel (0) target = $region33
    $region32: #{mlp_actor_forward.1} parent=1 // pred_region
      %55 = dma.done [#allocation3], 16
    $region33: #{mlp_actor_forward.1} parent=1 // pred_fallthru
      _
    // Predicated region
    $region34: #{mlp_actor_forward.1} parent=1 // pred_check
      _
    $region35: #{mlp_actor_forward.1} parent=1 // pred_check_branch
      %57 = sbr.rel (0) target = $region37
    $region36: #{mlp_actor_forward.1} parent=1 // pred_region
      %58 = dma.done [#allocation6], 16
    $region37: #{mlp_actor_forward.1} parent=1 // pred_fallthru
      _
    // Predicated region
    $region38: #{mlp_actor_forward.1} parent=1 // pred_check
      _
    $region39: #{mlp_actor_forward.1} parent=1 // pred_check_branch
      %60 = sbr.rel (0) target = $region41
    $region40: #{mlp_actor_forward.1} parent=1 // pred_region
      %61 = dma.done [#allocation6], 16
    $region41: #{mlp_actor_forward.1} parent=1 // pred_fallthru
      _
    %v63 = vld [vmem:[%s0] sm:$0x3]
    %v64 = vpack.c.bf16 %v63, %v63
    %v65 = vld [vmem:[%s1] sm:$0xf]
    %v66 = vld [vmem:[%s1 + $0x4] sm:$0xf]
    %v67 = vld [vmem:[#allocation2] sm:$0x1]
    %v69 = vlaneseq
    %v70 = vshrl.u32 %v69, 7
    %v71 = vsub.s32 0, %v70
    %v72 = vrot.slane %v67, %v71
    %v76 = vunpack.c.l.b16 %v65
    %v77 = vunpack.c.l.b16 %v66
    %v78 = vpack.c.b16 %v77, %v76
    %vm80 = vcmask 130048
    %v82 = vsel %vm80, %v64, 0
    %84 = vmatprep.subr.bf16.mxu0 0
    %85 = vmatpush1.bf16.msra.mxu0 0
    %86 = vmatprep.subr.bf16.mxu0 0
    %87 = vmatpush1.bf16.msra.mxu0 0
    %88 = vmatprep.subr.bf16.mxu0 0
    %89 = vmatpush1.bf16.msra.mxu0 0
    %90 = vmatprep.subr.bf16.mxu0 0
    %91 = vmatpush1.bf16.msra.mxu0 0
    %92 = vmatprep.subr.bf16.mxu0 0
    %93 = vmatpush1.bf16.msra.mxu0 0
    %94 = vmatprep.subr.bf16.mxu0 0
    %95 = vmatpush1.bf16.msra.mxu0 0
    %96 = vmatprep.subr.bf16.mxu0 0
    %97 = vmatpush1.bf16.msra.mxu0 0
    %98 = vmatprep.subr.bf16.mxu0 0
    %99 = vmatpush1.bf16.msra.mxu0 %v78
    %100 = vmatprep.subr.bf16.mxu0 0
    %101 = vmatpush2.bf16.msra.mxu0 0
    %102 = vmatprep.subr.bf16.mxu0 0
    %103 = vmatpush2.bf16.msra.mxu0 0
    %104 = vmatprep.subr.bf16.mxu0 0
    %105 = vmatpush2.bf16.msra.mxu0 0
    %106 = vmatprep.subr.bf16.mxu0 0
    %107 = vmatpush2.bf16.msra.mxu0 0
    %108 = vmatprep.subr.bf16.mxu0 0
    %109 = vmatpush2.bf16.msra.mxu0 0
    %110 = vmatprep.subr.bf16.mxu0 0
    %111 = vmatpush2.bf16.msra.mxu0 0
    %112 = vmatprep.subr.bf16.mxu0 0
    %113 = vmatpush2.bf16.msra.mxu0 0
    %114 = vmatprep.subr.bf16.mxu0 0
    %115 = vmatpush2.bf16.msra.mxu0 0
    %116 = vmatprep.mubr.bf16.mxu0 0
    %117 = vmatmul.mubr.bf16.gmra.mxu0 %v82
    %v118 = vpop.f32.mrf.mxu0
    %v119 = vadd.f32 %v72, %v118
    %v120 = vpop.f32.mrf.mxu0
    %v121 = vpop.f32.mrf.mxu0
    %v122 = vpop.f32.mrf.mxu0
    %123 = vdwg.mxu0
    %v124 = vmax.f32 %v119, 0.0
    %v125 = vpack.c.bf16 %v124, %v124
    %v126 = vld [vmem:[%s3] sm:$0xf]
    %v127 = vld [vmem:[%s3 + $0x4] sm:$0xf]
    %v128 = vld [vmem:[%s3 + $0x8] sm:$0xf]
    %v129 = vld [vmem:[%s3 + $0xc] sm:$0xf]
    %v130 = vld [vmem:[#allocation5] sm:$0x1]
    %v132 = vlaneseq
    %v133 = vshrl.u32 %v132, 7
    %v134 = vsub.s32 0, %v133
    %v135 = vrot.slane %v130, %v134
    %v141 = vunpack.c.l.b16 %v126
    %v142 = vunpack.c.l.b16 %v127
    %v143 = vunpack.c.l.b16 %v128
    %v144 = vunpack.c.l.b16 %v129
    %v145 = vpack.c.b16 %v142, %v141
    %v146 = vpack.c.b16 %v144, %v143
    %vm149 = vcmask 261120
    %v151 = vsel %vm149, %v125, 0
    %153 = vmatprep.subr.bf16.mxu0 0
    %154 = vmatpush1.bf16.msra.mxu0 0
    %155 = vmatprep.subr.bf16.mxu0 0
    %156 = vmatpush1.bf16.msra.mxu0 0
    %157 = vmatprep.subr.bf16.mxu0 0
    %158 = vmatpush1.bf16.msra.mxu0 0
    %159 = vmatprep.subr.bf16.mxu0 0
    %160 = vmatpush1.bf16.msra.mxu0 0
    %161 = vmatprep.subr.bf16.mxu0 0
    %162 = vmatpush1.bf16.msra.mxu0 0
    %163 = vmatprep.subr.bf16.mxu0 0
    %164 = vmatpush1.bf16.msra.mxu0 0
    %165 = vmatprep.subr.bf16.mxu0 0
    %166 = vmatpush1.bf16.msra.mxu0 %v146
    %167 = vmatprep.subr.bf16.mxu0 0
    %168 = vmatpush1.bf16.msra.mxu0 %v145
    %169 = vmatprep.subr.bf16.mxu0 0
    %170 = vmatpush2.bf16.msra.mxu0 0
    %171 = vmatprep.subr.bf16.mxu0 0
    %172 = vmatpush2.bf16.msra.mxu0 0
    %173 = vmatprep.subr.bf16.mxu0 0
    %174 = vmatpush2.bf16.msra.mxu0 0
    %175 = vmatprep.subr.bf16.mxu0 0
    %176 = vmatpush2.bf16.msra.mxu0 0
    %177 = vmatprep.subr.bf16.mxu0 0
    %178 = vmatpush2.bf16.msra.mxu0 0
    %179 = vmatprep.subr.bf16.mxu0 0
    %180 = vmatpush2.bf16.msra.mxu0 0
    %181 = vmatprep.subr.bf16.mxu0 0
    %182 = vmatpush2.bf16.msra.mxu0 0
    %183 = vmatprep.subr.bf16.mxu0 0
    %184 = vmatpush2.bf16.msra.mxu0 0
    %185 = vmatprep.mubr.bf16.mxu0 0
    %186 = vmatmul.mubr.bf16.gmra.mxu0 %v151
    %v187 = vpop.f32.mrf.mxu0
    %v188 = vadd.f32 %v135, %v187
    %v189 = vpop.f32.mrf.mxu0
    %v190 = vpop.f32.mrf.mxu0
    %v191 = vpop.f32.mrf.mxu0
    %192 = vdwg.mxu0
    %v193 = vmax.f32 %v188, 0.0
    %v194 = vpack.c.bf16 %v193, %v193
    %v195 = vld [vmem:[%s5] sm:$0xf]
    %v196 = vld [vmem:[%s5 + $0x4] sm:$0xf]
    %v197 = vld [vmem:[%s5 + $0x8] sm:$0xf]
    %v198 = vld [vmem:[%s5 + $0xc] sm:$0xf]
    %v199 = vld [vmem:[#allocation7] sm:$0x1]
    %v201 = vlaneseq
    %v202 = vshrl.u32 %v201, 7
    %v203 = vsub.s32 0, %v202
    %v204 = vrot.slane %v199, %v203
    %v210 = vunpack.c.l.b16 %v195
    %v211 = vunpack.c.l.b16 %v196
    %v212 = vunpack.c.l.b16 %v197
    %v213 = vunpack.c.l.b16 %v198
    %v214 = vpack.c.b16 %v211, %v210
    %v215 = vpack.c.b16 %v213, %v212
    %v219 = vsel %vm149, %v194, 0
    %221 = vmatprep.subr.bf16.mxu0 0
    %222 = vmatpush1.bf16.msra.mxu0 0
    %223 = vmatprep.subr.bf16.mxu0 0
    %224 = vmatpush1.bf16.msra.mxu0 0
    %225 = vmatprep.subr.bf16.mxu0 0
    %226 = vmatpush1.bf16.msra.mxu0 0
    %227 = vmatprep.subr.bf16.mxu0 0
    %228 = vmatpush1.bf16.msra.mxu0 0
    %229 = vmatprep.subr.bf16.mxu0 0
    %230 = vmatpush1.bf16.msra.mxu0 0
    %231 = vmatprep.subr.bf16.mxu0 0
    %232 = vmatpush1.bf16.msra.mxu0 0
    %233 = vmatprep.subr.bf16.mxu0 0
    %234 = vmatpush1.bf16.msra.mxu0 %v215
    %235 = vmatprep.subr.bf16.mxu0 0
    %236 = vmatpush1.bf16.msra.mxu0 %v214
    %237 = vmatprep.subr.bf16.mxu0 0
    %238 = vmatpush2.bf16.msra.mxu0 0
    %239 = vmatprep.subr.bf16.mxu0 0
    %240 = vmatpush2.bf16.msra.mxu0 0
    %241 = vmatprep.subr.bf16.mxu0 0
    %242 = vmatpush2.bf16.msra.mxu0 0
    %243 = vmatprep.subr.bf16.mxu0 0
    %244 = vmatpush2.bf16.msra.mxu0 0
    %245 = vmatprep.subr.bf16.mxu0 0
    %246 = vmatpush2.bf16.msra.mxu0 0
    %247 = vmatprep.subr.bf16.mxu0 0
    %248 = vmatpush2.bf16.msra.mxu0 0
    %249 = vmatprep.subr.bf16.mxu0 0
    %250 = vmatpush2.bf16.msra.mxu0 0
    %251 = vmatprep.subr.bf16.mxu0 0
    %252 = vmatpush2.bf16.msra.mxu0 0
    %253 = vmatprep.mubr.bf16.mxu0 0
    %254 = vmatmul.mubr.bf16.gmra.mxu0 %v219
    %v255 = vpop.f32.mrf.mxu0
    %v256 = vadd.f32 %v204, %v255
    %v257 = vpop.f32.mrf.mxu0
    %v258 = vpop.f32.mrf.mxu0
    %v259 = vpop.f32.mrf.mxu0
    %260 = vdwg.mxu0
    %v261 = vtanh.pop %v256
    %v262 = vmul.f32 %v261, 2.0
    %vm263 = vcmask 25600
    %264 = vst.msk [vmem:[#allocation8] sm:$0x3] %vm263, %v262
    // Predicated region
    $region42: #{mlp_actor_forward.1} parent=1 // pred_check
      _
    $region43: #{mlp_actor_forward.1} parent=1 // pred_check_branch
      %266 = sbr.rel (0) target = $region45
    $region44: #{mlp_actor_forward.1} parent=1 // pred_region
      %s268 = ssub.s32 32, 32
      %269 = vsyncadd [#allocation4], %s268
      %s271 = sshll.u32 [#allocation8], 4
      %s272 = int_to_ptr.vmem [resolvable:$true] %s271
      %274 = dma.vmem_to_hbm [thread:$0]  %s272, 32, %s7, [#allocation4]
    $region45: #{mlp_actor_forward.1} parent=1 // pred_fallthru
      _
    // Predicated region
    $region46: #{mlp_actor_forward.1} parent=1 // pred_check
      _
    $region47: #{mlp_actor_forward.1} parent=1 // pred_check_branch
      %276 = sbr.rel (0) target = $region49
    $region48: #{mlp_actor_forward.1} parent=1 // pred_region
      %277 = dma.done [#allocation4], 32
    $region49: #{mlp_actor_forward.1} parent=1 // pred_fallthru
      _
    %278 = vsyncpa [#allocation3], 1
    %279 = vsyncpa [#allocation6], 1
    %280 = vsyncpa [#allocation4], 1

</llo_original>
